<compile_context>
chip_gen: v7x
topology: tpu7x:2x2x1
jax: 0.10.0
libtpu: 0.0.40
codegen_flags: <defaults>
</compile_context>

<pallas_src>
import functools

import jax
import jax.numpy as jnp
from jax.experimental import pallas as pl
from jax.experimental.pallas import tpu as pltpu


def mlp_kernel(x_ref, w1_ref, b1_ref, w2_ref, b2_ref, w3_ref, b3_ref, o_ref):
    x = x_ref[...]                                   # (input_dim, block_b)
    if x_ref.shape[0] == 1:
        # K=1 contraction: outer product as a VPU broadcast multiply (frees the MXU,
        # avoids a full systolic pass for a single MAC per lane).
        h1 = w1_ref[...] * x + b1_ref[...]           # (64,1)*(1,Bb) -> (64,Bb)
    else:
        h1 = jnp.dot(w1_ref[...], x, preferred_element_type=jnp.float32) + b1_ref[...]
    h1 = jnp.maximum(h1, 0.0)

    h2 = jnp.dot(w2_ref[...], h1, preferred_element_type=jnp.float32) + b2_ref[...]
    h2 = jnp.maximum(h2, 0.0)                        # (32, block_b)

    out = jnp.dot(w3_ref[...], h2, preferred_element_type=jnp.float32) + b3_ref[...]
    o_ref[...] = out.astype(o_ref.dtype)             # (4, block_b) lane-dense store


@functools.partial(jax.jit, static_argnames=("block_b",))
def mlp_forward(x, w1, b1, w2, b2, w3, b3, *, block_b=1024):
    """x: (B, input_dim). Weights in PyTorch layout: w*(out,in), b*(out,)."""
    B, input_dim = x.shape
    h1d, h2d, out_dim = w1.shape[0], w2.shape[0], w3.shape[0]

    # Batch goes on the lane axis; biases become (out, 1) columns.
    x_t = x.T                                        # (input_dim, B)
    b1c = b1.reshape(h1d, 1)
    b2c = b2.reshape(h2d, 1)
    b3c = b3.reshape(out_dim, 1)

    # Pad batch to a multiple of the lane tile so blocks stay (…,128)-aligned.
    n_blocks = pl.cdiv(B, block_b)
    B_pad = n_blocks * block_b
    if B_pad != B:
        x_t = jnp.pad(x_t, ((0, 0), (0, B_pad - B)))

    full = lambda a: pl.BlockSpec(a.shape, lambda i: (0, 0))  # tiny weights stay VMEM-resident

    out_t = pl.pallas_call(
        mlp_kernel,
        out_shape=jax.ShapeDtypeStruct((out_dim, B_pad), x.dtype),
        grid_spec=pltpu.PrefetchScalarGridSpec(
            num_scalar_prefetch=0,
            grid=(n_blocks,),
            in_specs=[
                pl.BlockSpec((input_dim, block_b), lambda i: (0, i)),
                full(w1), full(b1c),
                full(w2), full(b2c),
                full(w3), full(b3c),
            ],
            out_specs=pl.BlockSpec((out_dim, block_b), lambda i: (0, i)),
        ),
        compiler_params=pltpu.CompilerParams(
            dimension_semantics=("parallel",),
        ),
    )(x_t, w1, b1c, w2, b2c, w3, b3c)

    return out_t[:, :B].T                            # back to (B, out_dim)


def init_params(key, input_dim=1, hidden1=64, hidden2=32, output_dim=4):
    # PyTorch nn.Linear-style layout (out, in) and U(-1/sqrt(fan_in), 1/sqrt(fan_in)) init.
    ks = jax.random.split(key, 6)

    def lin(kw, kb, fan_in, fan_out):
        bound = 1.0 / jnp.sqrt(fan_in)
        w = jax.random.uniform(kw, (fan_out, fan_in), jnp.float32, -bound, bound)
        b = jax.random.uniform(kb, (fan_out,), jnp.float32, -bound, bound)
        return w, b

    w1, b1 = lin(ks[0], ks[1], input_dim, hidden1)
    w2, b2 = lin(ks[2], ks[3], hidden1, hidden2)
    w3, b3 = lin(ks[4], ks[5], hidden2, output_dim)
    return w1, b1, w2, b2, w3, b3


if __name__ == "__main__":
    key = jax.random.PRNGKey(0)
    k_params, k_x = jax.random.split(key)

    B, INPUT_DIM = 512, 1
    params = init_params(k_params, input_dim=INPUT_DIM, hidden1=64, hidden2=32, output_dim=4)
    x = jax.random.normal(k_x, (B, INPUT_DIM), jnp.float32)

    # block_b=256 -> 2 grid steps (exercises tiling and keeps both v7x TCs busy).
    out = mlp_forward(x, *params, block_b=256)
    out = jax.block_until_ready(out)

    # Reference in plain JAX (same math as the PyTorch module: y = x @ W.T + b).
    w1, b1, w2, b2, w3, b3 = params
    h1 = jnp.maximum(x @ w1.T + b1, 0.0)
    h2 = jnp.maximum(h1 @ w2.T + b2, 0.0)
    ref = h2 @ w3.T + b3
    assert out.shape == (B, 4)
    assert jnp.allclose(out, ref, atol=1e-5, rtol=1e-5)

    print("KERNEL_OK")
</pallas_src>

<mosaic_0001>
module attributes {stable_mosaic.version = 11 : i64} {
  func.func @mlp_kernel(%arg0: i32, %arg1: memref<1x256xf32, #tpu.memory_space<vmem>>, %arg2: memref<64x1xf32, #tpu.memory_space<vmem>>, %arg3: memref<64x1xf32, #tpu.memory_space<vmem>>, %arg4: memref<32x64xf32, #tpu.memory_space<vmem>>, %arg5: memref<32x1xf32, #tpu.memory_space<vmem>>, %arg6: memref<4x32xf32, #tpu.memory_space<vmem>>, %arg7: memref<4x1xf32, #tpu.memory_space<vmem>>, %arg8: memref<4x256xf32, #tpu.memory_space<vmem>>) attributes {dimension_semantics = [#tpu.dimension_semantics<parallel>], iteration_bounds = array<i64: 2>, scalar_prefetch = 0 : i64, scratch_operands = 0 : i64, tpu.core_type = #tpu.core_type<tc>, window_params = [{transform_indices = @transform_0, window_bounds = array<i64: 1, 256>}, {pipeline_mode = #tpu.pipeline_mode<synchronous>, transform_indices = @transform_1, window_bounds = array<i64: 64, 1>}, {pipeline_mode = #tpu.pipeline_mode<synchronous>, transform_indices = @transform_2, window_bounds = array<i64: 64, 1>}, {pipeline_mode = #tpu.pipeline_mode<synchronous>, transform_indices = @transform_3, window_bounds = array<i64: 32, 64>}, {pipeline_mode = #tpu.pipeline_mode<synchronous>, transform_indices = @transform_4, window_bounds = array<i64: 32, 1>}, {pipeline_mode = #tpu.pipeline_mode<synchronous>, transform_indices = @transform_5, window_bounds = array<i64: 4, 32>}, {pipeline_mode = #tpu.pipeline_mode<synchronous>, transform_indices = @transform_6, window_bounds = array<i64: 4, 1>}, {transform_indices = @transform_7, window_bounds = array<i64: 4, 256>}]} {
    %c0 = arith.constant 0 : index
    %c0_0 = arith.constant 0 : index
    %0 = vector.load %arg1[%c0, %c0_0] : memref<1x256xf32, #tpu.memory_space<vmem>>, vector<1x256xf32>
    %c0_1 = arith.constant 0 : index
    %c0_2 = arith.constant 0 : index
    %1 = vector.load %arg2[%c0_1, %c0_2] : memref<64x1xf32, #tpu.memory_space<vmem>>, vector<64x1xf32>
    %2 = vector.broadcast %1 : vector<64x1xf32> to vector<64x256xf32>
    %3 = vector.broadcast %0 : vector<1x256xf32> to vector<64x256xf32>
    %4 = arith.mulf %2, %3 : vector<64x256xf32>
    %c0_3 = arith.constant 0 : index
    %c0_4 = arith.constant 0 : index
    %5 = vector.load %arg3[%c0_3, %c0_4] : memref<64x1xf32, #tpu.memory_space<vmem>>, vector<64x1xf32>
    %6 = vector.broadcast %5 : vector<64x1xf32> to vector<64x256xf32>
    %7 = arith.addf %4, %6 : vector<64x256xf32>
    %cst = arith.constant 0.000000e+00 : f32
    %8 = vector.broadcast %cst : f32 to vector<64x256xf32>
    %9 = arith.maximumf %7, %8 : vector<64x256xf32>
    %c0_5 = arith.constant 0 : index
    %c0_6 = arith.constant 0 : index
    %10 = vector.load %arg4[%c0_5, %c0_6] : memref<32x64xf32, #tpu.memory_space<vmem>>, vector<32x64xf32>
    %cst_7 = arith.constant dense<0.000000e+00> : vector<32x256xf32>
    %11 = tpu.matmul %10, %9, %cst_7 {dimension_numbers = #tpu.dot_dimension_numbers<[1], [0], [0], [1], [0, 0, 1, 1], [], []>} : vector<32x64xf32>, vector<64x256xf32>, vector<32x256xf32> -> vector<32x256xf32>
    %c0_8 = arith.constant 0 : index
    %c0_9 = arith.constant 0 : index
    %12 = vector.load %arg5[%c0_8, %c0_9] : memref<32x1xf32, #tpu.memory_space<vmem>>, vector<32x1xf32>
    %13 = vector.broadcast %12 : vector<32x1xf32> to vector<32x256xf32>
    %14 = arith.addf %11, %13 : vector<32x256xf32>
    %cst_10 = arith.constant 0.000000e+00 : f32
    %15 = vector.broadcast %cst_10 : f32 to vector<32x256xf32>
    %16 = arith.maximumf %14, %15 : vector<32x256xf32>
    %c0_11 = arith.constant 0 : index
    %c0_12 = arith.constant 0 : index
    %17 = vector.load %arg6[%c0_11, %c0_12] : memref<4x32xf32, #tpu.memory_space<vmem>>, vector<4x32xf32>
    %cst_13 = arith.constant dense<0.000000e+00> : vector<4x256xf32>
    %18 = tpu.matmul %17, %16, %cst_13 {dimension_numbers = #tpu.dot_dimension_numbers<[1], [0], [0], [1], [0, 0, 1, 1], [], []>} : vector<4x32xf32>, vector<32x256xf32>, vector<4x256xf32> -> vector<4x256xf32>
    %c0_14 = arith.constant 0 : index
    %c0_15 = arith.constant 0 : index
    %19 = vector.load %arg7[%c0_14, %c0_15] : memref<4x1xf32, #tpu.memory_space<vmem>>, vector<4x1xf32>
    %20 = vector.broadcast %19 : vector<4x1xf32> to vector<4x256xf32>
    %21 = arith.addf %18, %20 : vector<4x256xf32>
    %c0_16 = arith.constant 0 : index
    %c0_17 = arith.constant 0 : index
    %22 = vector.load %arg8[%c0_16, %c0_17] : memref<4x256xf32, #tpu.memory_space<vmem>>, vector<4x256xf32>
    tpu.vector_store %arg8[%c0_16, %c0_17], %21 {strides = array<i32>} : memref<4x256xf32, #tpu.memory_space<vmem>>, vector<4x256xf32>,
    return
  }
  func.func @transform_0(%arg0: i32) -> (i32, i32) {
    %c0_i32 = arith.constant 0 : i32
    %c0_i32_0 = arith.constant 0 : i32
    return %c0_i32, %arg0 : i32, i32
  }
  func.func @transform_1(%arg0: i32) -> (i32, i32) {
    %c0_i32 = arith.constant 0 : i32
    %c0_i32_0 = arith.constant 0 : i32
    %c0_i32_1 = arith.constant 0 : i32
    return %c0_i32, %c0_i32_0 : i32, i32
  }
  func.func @transform_2(%arg0: i32) -> (i32, i32) {
    %c0_i32 = arith.constant 0 : i32
    %c0_i32_0 = arith.constant 0 : i32
    %c0_i32_1 = arith.constant 0 : i32
    return %c0_i32, %c0_i32_0 : i32, i32
  }
  func.func @transform_3(%arg0: i32) -> (i32, i32) {
    %c0_i32 = arith.constant 0 : i32
    %c0_i32_0 = arith.constant 0 : i32
    %c0_i32_1 = arith.constant 0 : i32
    return %c0_i32, %c0_i32_0 : i32, i32
  }
  func.func @transform_4(%arg0: i32) -> (i32, i32) {
    %c0_i32 = arith.constant 0 : i32
    %c0_i32_0 = arith.constant 0 : i32
    %c0_i32_1 = arith.constant 0 : i32
    return %c0_i32, %c0_i32_0 : i32, i32
  }
  func.func @transform_5(%arg0: i32) -> (i32, i32) {
    %c0_i32 = arith.constant 0 : i32
    %c0_i32_0 = arith.constant 0 : i32
    %c0_i32_1 = arith.constant 0 : i32
    return %c0_i32, %c0_i32_0 : i32, i32
  }
  func.func @transform_6(%arg0: i32) -> (i32, i32) {
    %c0_i32 = arith.constant 0 : i32
    %c0_i32_0 = arith.constant 0 : i32
    %c0_i32_1 = arith.constant 0 : i32
    return %c0_i32, %c0_i32_0 : i32, i32
  }
  func.func @transform_7(%arg0: i32) -> (i32, i32) {
    %c0_i32 = arith.constant 0 : i32
    %c0_i32_0 = arith.constant 0 : i32
    return %c0_i32, %arg0 : i32, i32
  }
}

</mosaic_0001>

<llo_original>
// kernel: mlp_forward.1
$region0: #{mlp_forward.1}
  #allocation0 [shape = 'u32[]', space=smem, size = 0x4, offset = 0x4, fixed_abs, tag = 'smem constant byte address 0x4 - core index']
  #allocation1 [shape = 'u32[144,128]{1,0:T(1,128)}', space=vmem, size = 0x12000, scoped, tag = 'internal scratch']
  %s0 = inlined_call_operand.vmem [shape: f32[1,512], index: 0, kind: input, shape index: {}]
  %s1 = inlined_call_operand.vmem [shape: f32[64,1], index: 1, kind: input, shape index: {}]
  %s2 = inlined_call_operand.vmem [shape: f32[64,1], index: 2, kind: input, shape index: {}]
  %s3 = inlined_call_operand.vmem [shape: f32[32,64], index: 3, kind: input, shape index: {}]
  %s4 = inlined_call_operand.vmem [shape: f32[32,1], index: 4, kind: input, shape index: {}]
  %s5 = inlined_call_operand.vmem [shape: f32[4,32], index: 5, kind: input, shape index: {}]
  %s6 = inlined_call_operand.vmem [shape: f32[4,1], index: 6, kind: input, shape index: {}]
  %s7 = inlined_call_operand.hbm [shape: f32[4,512], index: 7, kind: output, shape index: {}]
  %s8 = sld [smem:[#allocation0]]
  $region61: #{mlp_forward.1} parent=0
    _
  %s10 = ssub.s32 1, %s8
  %s11 = scalar_select 0, %s10, %s8
  $region1: #{mlp_forward.1} parent=0
    #allocation2 [shape = 'u8[8192]{0}', space=vmem, size = 0x2000, scoped, tag = 'output window, operand 0']
    #allocation3 [shape = 's32[2]{0}', space=sflag, size = 0x8, scoped, tag = 'scoped memory for mlp_forward.1']
    %12 = vsyncpa [#allocation3], 0
    %s13 = scalar_lea.sflag [#allocation3], 1
    %14 = vsyncpa %s13, 0
    loop: start=0, step=1, limit=4
    $region2: #{mlp_forward.1} parent=1 // loop_pre_header
      _
    $region3: #{mlp_forward.1} parent=1 // loop_header
      %s16 = sphi 0, %s20
      %p17 = scmp.ge.s32.totalorder %s16, 4
      %s26 = sphi 0, %s28
      %s29 = sphi 0, %s26
      %s30 = sphi 0, %s29
      %s46 = sphi 0, %s30
      %s50 = sphi 0, %s50
      %s52 = sphi 0, %s50
      %s53 = sphi 0, %s52
      %s67 = sphi 0, %s53
      %s71 = sphi 0, %s71
      %s73 = sphi 0, %s71
      %s74 = sphi 0, %s73
      %s88 = sphi 0, %s74
      %s92 = sphi 0, %s92
      %s94 = sphi 0, %s92
      %s95 = sphi 0, %s94
      %s109 = sphi 0, %s95
      %s113 = sphi 0, %s113
      %s115 = sphi 0, %s113
      %s116 = sphi 0, %s115
      %s130 = sphi 0, %s116
      %s134 = sphi 0, %s134
      %s136 = sphi 0, %s134
      %s137 = sphi 0, %s136
      %s151 = sphi 0, %s137
      %s155 = sphi 0, %s155
      %s157 = sphi 0, %s155
      %s158 = sphi 0, %s157
      %s172 = sphi 0, %s158
      %s178 = sphi 0, %s180
      %s181 = sphi 0, %s178
      %s182 = sphi 0, %s181
      %s198 = sphi 0, %s182
    $region4: #{mlp_forward.1} parent=1 // loop_header_branch
      %19 = sbr.rel (%p17) target = $region8
    $region5: #{mlp_forward.1} parent=1 // loop_body
      %s21 = ssub.s32 %s16, 1
      %s22 = ssub.s32 %s16, 2
      %s23 = sadd.s32 %s16, 1
      %s24 = ssub.s32 %s16, %s23
      %p25 = scmp.eq.s32.totalorder %s24, 0
      %s27 = sadd.s32 %s26, 1
      %s28 = scalar_select %p25, %s26, %s27
      %p31 = pneg %p25
      %p32 = scmp.eq.s32.totalorder %s16, 1
      %p33 = por %p31, %p32
      %p34 = scmp.ne.s32.totalorder %s26, %s29
      %p35 = scmp.eq.s32.totalorder %s16, 0
      %p36 = por %p34, %p35
      %p37 = scmp.ne.s32.totalorder %s26, %s29
      %p38 = scmp.eq.s32.totalorder %s21, 1
      %p39 = por %p37, %p38
      %p40 = scmp.ne.s32.totalorder %s29, %s30
      %p41 = scmp.eq.s32.totalorder %s21, 0
      %p42 = por %p40, %p41
      %p43 = scmp.ne.s32.totalorder %s29, %s30
      %p44 = scmp.eq.s32.totalorder %s22, 1
      %p45 = por %p43, %p44
      %p47 = scmp.ne.s32.totalorder %s30, %s46
      %p48 = scmp.eq.s32.totalorder %s22, 0
      %p49 = por %p47, %p48
      %s51 = sadd.s32 %s50, 1
      %p54 = scmp.eq.s32.totalorder %s16, 1
      %p55 = scmp.ne.s32.totalorder %s50, %s52
      %p56 = scmp.eq.s32.totalorder %s16, 0
      %p57 = por %p55, %p56
      %p58 = scmp.ne.s32.totalorder %s50, %s52
      %p59 = scmp.eq.s32.totalorder %s21, 1
      %p60 = por %p58, %p59
      %p61 = scmp.ne.s32.totalorder %s52, %s53
      %p62 = scmp.eq.s32.totalorder %s21, 0
      %p63 = por %p61, %p62
      %p64 = scmp.ne.s32.totalorder %s52, %s53
      %p65 = scmp.eq.s32.totalorder %s22, 1
      %p66 = por %p64, %p65
      %p68 = scmp.ne.s32.totalorder %s53, %s67
      %p69 = scmp.eq.s32.totalorder %s22, 0
      %p70 = por %p68, %p69
      %s72 = sadd.s32 %s71, 1
      %p75 = scmp.eq.s32.totalorder %s16, 1
      %p76 = scmp.ne.s32.totalorder %s71, %s73
      %p77 = scmp.eq.s32.totalorder %s16, 0
      %p78 = por %p76, %p77
      %p79 = scmp.ne.s32.totalorder %s71, %s73
      %p80 = scmp.eq.s32.totalorder %s21, 1
      %p81 = por %p79, %p80
      %p82 = scmp.ne.s32.totalorder %s73, %s74
      %p83 = scmp.eq.s32.totalorder %s21, 0
      %p84 = por %p82, %p83
      %p85 = scmp.ne.s32.totalorder %s73, %s74
      %p86 = scmp.eq.s32.totalorder %s22, 1
      %p87 = por %p85, %p86
      %p89 = scmp.ne.s32.totalorder %s74, %s88
      %p90 = scmp.eq.s32.totalorder %s22, 0
      %p91 = por %p89, %p90
      %s93 = sadd.s32 %s92, 1
      %p96 = scmp.eq.s32.totalorder %s16, 1
      %p97 = scmp.ne.s32.totalorder %s92, %s94
      %p98 = scmp.eq.s32.totalorder %s16, 0
      %p99 = por %p97, %p98
      %p100 = scmp.ne.s32.totalorder %s92, %s94
      %p101 = scmp.eq.s32.totalorder %s21, 1
      %p102 = por %p100, %p101
      %p103 = scmp.ne.s32.totalorder %s94, %s95
      %p104 = scmp.eq.s32.totalorder %s21, 0
      %p105 = por %p103, %p104
      %p106 = scmp.ne.s32.totalorder %s94, %s95
      %p107 = scmp.eq.s32.totalorder %s22, 1
      %p108 = por %p106, %p107
      %p110 = scmp.ne.s32.totalorder %s95, %s109
      %p111 = scmp.eq.s32.totalorder %s22, 0
      %p112 = por %p110, %p111
      %s114 = sadd.s32 %s113, 1
      %p117 = scmp.eq.s32.totalorder %s16, 1
      %p118 = scmp.ne.s32.totalorder %s113, %s115
      %p119 = scmp.eq.s32.totalorder %s16, 0
      %p120 = por %p118, %p119
      %p121 = scmp.ne.s32.totalorder %s113, %s115
      %p122 = scmp.eq.s32.totalorder %s21, 1
      %p123 = por %p121, %p122
      %p124 = scmp.ne.s32.totalorder %s115, %s116
      %p125 = scmp.eq.s32.totalorder %s21, 0
      %p126 = por %p124, %p125
      %p127 = scmp.ne.s32.totalorder %s115, %s116
      %p128 = scmp.eq.s32.totalorder %s22, 1
      %p129 = por %p127, %p128
      %p131 = scmp.ne.s32.totalorder %s116, %s130
      %p132 = scmp.eq.s32.totalorder %s22, 0
      %p133 = por %p131, %p132
      %s135 = sadd.s32 %s134, 1
      %p138 = scmp.eq.s32.totalorder %s16, 1
      %p139 = scmp.ne.s32.totalorder %s134, %s136
      %p140 = scmp.eq.s32.totalorder %s16, 0
      %p141 = por %p139, %p140
      %p142 = scmp.ne.s32.totalorder %s134, %s136
      %p143 = scmp.eq.s32.totalorder %s21, 1
      %p144 = por %p142, %p143
      %p145 = scmp.ne.s32.totalorder %s136, %s137
      %p146 = scmp.eq.s32.totalorder %s21, 0
      %p147 = por %p145, %p146
      %p148 = scmp.ne.s32.totalorder %s136, %s137
      %p149 = scmp.eq.s32.totalorder %s22, 1
      %p150 = por %p148, %p149
      %p152 = scmp.ne.s32.totalorder %s137, %s151
      %p153 = scmp.eq.s32.totalorder %s22, 0
      %p154 = por %p152, %p153
      %s156 = sadd.s32 %s155, 1
      %p159 = scmp.eq.s32.totalorder %s16, 1
      %p160 = scmp.ne.s32.totalorder %s155, %s157
      %p161 = scmp.eq.s32.totalorder %s16, 0
      %p162 = por %p160, %p161
      %p163 = scmp.ne.s32.totalorder %s155, %s157
      %p164 = scmp.eq.s32.totalorder %s21, 1
      %p165 = por %p163, %p164
      %p166 = scmp.ne.s32.totalorder %s157, %s158
      %p167 = scmp.eq.s32.totalorder %s21, 0
      %p168 = por %p166, %p167
      %p169 = scmp.ne.s32.totalorder %s157, %s158
      %p170 = scmp.eq.s32.totalorder %s22, 1
      %p171 = por %p169, %p170
      %p173 = scmp.ne.s32.totalorder %s158, %s172
      %p174 = scmp.eq.s32.totalorder %s22, 0
      %p175 = por %p173, %p174
      %s176 = ssub.s32 %s16, %s23
      %p177 = scmp.eq.s32.totalorder %s176, 0
      %s179 = sadd.s32 %s178, 1
      %s180 = scalar_select %p177, %s178, %s179
      %p183 = pneg %p177
      %p184 = scmp.eq.s32.totalorder %s16, 1
      %p185 = por %p183, %p184
      %p186 = scmp.ne.s32.totalorder %s178, %s181
      %p187 = scmp.eq.s32.totalorder %s16, 0
      %p188 = por %p186, %p187
      %p189 = scmp.ne.s32.totalorder %s178, %s181
      %p190 = scmp.eq.s32.totalorder %s21, 1
      %p191 = por %p189, %p190
      %p192 = scmp.ne.s32.totalorder %s181, %s182
      %p193 = scmp.eq.s32.totalorder %s21, 0
      %p194 = por %p192, %p193
      %p195 = scmp.ne.s32.totalorder %s181, %s182
      %p196 = scmp.eq.s32.totalorder %s22, 1
      %p197 = por %p195, %p196
      %p199 = scmp.ne.s32.totalorder %s182, %s198
      %p200 = scmp.eq.s32.totalorder %s22, 0
      %p201 = por %p199, %p200
      %p202 = scmp.le.s32.totalorder 1, %s16
      %p203 = scmp.lt.s32.totalorder %s16, 3
      %p204 = pnand %p202, %p203
      %p205 = pneg %p204
      // Predicated region
      $region9: #{mlp_forward.1} parent=5 // pred_check
        _
      $region10: #{mlp_forward.1} parent=5 // pred_check_branch
        %207 = sbr.rel (%p204) target = $region12
      $region11: #{mlp_forward.1} parent=5 // pred_region
        %s208 = ssub.s32 %s16, 1
        // Predicated region
        $region13: #{mlp_forward.1} parent=11 // pred_check
          %p209 = pneg %p63
        $region14: #{mlp_forward.1} parent=11 // pred_check_branch
          %211 = sbr.rel (%p209) target = $region16
        $region15: #{mlp_forward.1} parent=11 // pred_region
          _
        $region16: #{mlp_forward.1} parent=11 // pred_fallthru
          _
        // Predicated region
        $region17: #{mlp_forward.1} parent=11 // pred_check
          %p212 = pneg %p84
        $region18: #{mlp_forward.1} parent=11 // pred_check_branch
          %214 = sbr.rel (%p212) target = $region20
        $region19: #{mlp_forward.1} parent=11 // pred_region
          _
        $region20: #{mlp_forward.1} parent=11 // pred_fallthru
          _
        // Predicated region
        $region21: #{mlp_forward.1} parent=11 // pred_check
          %p215 = pneg %p105
        $region22: #{mlp_forward.1} parent=11 // pred_check_branch
          %217 = sbr.rel (%p215) target = $region24
        $region23: #{mlp_forward.1} parent=11 // pred_region
          _
        $region24: #{mlp_forward.1} parent=11 // pred_fallthru
          _
        // Predicated region
        $region25: #{mlp_forward.1} parent=11 // pred_check
          %p218 = pneg %p126
        $region26: #{mlp_forward.1} parent=11 // pred_check_branch
          %220 = sbr.rel (%p218) target = $region28
        $region27: #{mlp_forward.1} parent=11 // pred_region
          _
        $region28: #{mlp_forward.1} parent=11 // pred_fallthru
          _
        // Predicated region
        $region29: #{mlp_forward.1} parent=11 // pred_check
          %p221 = pneg %p147
        $region30: #{mlp_forward.1} parent=11 // pred_check_branch
          %223 = sbr.rel (%p221) target = $region32
        $region31: #{mlp_forward.1} parent=11 // pred_region
          _
        $region32: #{mlp_forward.1} parent=11 // pred_fallthru
          _
        // Predicated region
        $region33: #{mlp_forward.1} parent=11 // pred_check
          %p224 = pneg %p168
        $region34: #{mlp_forward.1} parent=11 // pred_check_branch
          %226 = sbr.rel (%p224) target = $region36
        $region35: #{mlp_forward.1} parent=11 // pred_region
          _
        $region36: #{mlp_forward.1} parent=11 // pred_fallthru
          _
      $region12: #{mlp_forward.1} parent=5 // pred_fallthru
        _
      %p227 = scmp.lt.s32.totalorder %s16, 2
      // Predicated region
      $region37: #{mlp_forward.1} parent=5 // pred_check
        %p228 = pneg %p227
      $region38: #{mlp_forward.1} parent=5 // pred_check_branch
        %230 = sbr.rel (%p228) target = $region40
      $region39: #{mlp_forward.1} parent=5 // pred_region
        // Predicated region
        $region41: #{mlp_forward.1} parent=39 // pred_check
          %p231 = pneg %p36
        $region42: #{mlp_forward.1} parent=39 // pred_check_branch
          %233 = sbr.rel (%p231) target = $region44
        $region43: #{mlp_forward.1} parent=39 // pred_region
          %s234 = smul.u32 2, %s16
          %p235 = scmp.lt.s32.totalorder %s234, 3
          %s236 = scalar_select %p235, %s234, 3
          %s237 = scalar_lea.vmem %s0, %s236
          %s238 = smul.u32 2, %s16
        $region44: #{mlp_forward.1} parent=39 // pred_fallthru
          _
      $region40: #{mlp_forward.1} parent=5 // pred_fallthru
        _
      %p239 = scmp.le.s32.totalorder 1, %s16
      %p240 = scmp.lt.s32.totalorder %s16, 3
      %p241 = pnand %p239, %p240
      %p242 = pneg %p241
      // Predicated region
      $region45: #{mlp_forward.1} parent=5 // pred_check
        _
      $region46: #{mlp_forward.1} parent=5 // pred_check_branch
        %244 = sbr.rel (%p241) target = $region48
      $region47: #{mlp_forward.1} parent=5 // pred_region
        %s245 = ssub.s32 %s16, 1
        %s246 = smul.u32 2, %s21
        %p247 = scmp.lt.s32.totalorder %s246, 3
        %s248 = scalar_select %p247, %s246, 3
        %s249 = scalar_lea.vmem %s0, %s248
        %p250 = pneg %p42
        %p251 = pneg %p39
        %p252 = pneg %p63
        %p253 = pneg %p60
        %p254 = pneg %p84
        %p255 = pneg %p81
        %p256 = pneg %p105
        %p257 = pneg %p102
        %p258 = pneg %p126
        %p259 = pneg %p123
        %p260 = pneg %p147
        %p261 = pneg %p144
        %p262 = pneg %p168
        %p263 = pneg %p165
        %p264 = pneg %p194
        %p265 = pneg %p191
        %s266 = sand.u32 %s181, 1
        %s267 = scalar_lea.sflag [#allocation3], %s266
        %s268 = sand.u32 %s181, 1
        %s269 = smul.addr %s268, 8
        %s270 = scalar_lea.vmem [#allocation2], %s269
        %s271 = smul.u32 2, %s21
        %p272 = scmp.lt.s32.totalorder %s271, 3
        %s273 = scalar_select %p272, %s271, 3
        %s274 = scalar_lea.vmem %s0, %s273
        %s275 = smul.u32 2, %s21
        %s276 = smul.u32 2, %s21
        %v277 = vld [vmem:[%s274] sm:$0x3]
        %v278 = vld [vmem:[%s1] sm:$0xff]
        %v279 = vld [vmem:[%s1 + $0x8] sm:$0xff]
        %v280 = vld [vmem:[%s1 + $0x10] sm:$0xff]
        %v281 = vld [vmem:[%s1 + $0x18] sm:$0xff]
        %v282 = vld [vmem:[%s1 + $0x20] sm:$0xff]
        %v283 = vld [vmem:[%s1 + $0x28] sm:$0xff]
        %v284 = vld [vmem:[%s1 + $0x30] sm:$0xff]
        %v285 = vld [vmem:[%s1 + $0x38] sm:$0xff]
        %287 = vset.pattern.permute.xlu0 0
        %288 = vperm.xlu0 %287, %v278
        %v289 = vpop.permute.xlu0 %288
        %292 = vset.pattern.permute.xlu0 0
        %293 = vperm.xlu0 %292, %v279
        %v294 = vpop.permute.xlu0 %293
        %297 = vset.pattern.permute.xlu0 0
        %298 = vperm.xlu0 %297, %v280
        %v299 = vpop.permute.xlu0 %298
        %302 = vset.pattern.permute.xlu0 0
        %303 = vperm.xlu0 %302, %v281
        %v304 = vpop.permute.xlu0 %303
        %307 = vset.pattern.permute.xlu0 0
        %308 = vperm.xlu0 %307, %v282
        %v309 = vpop.permute.xlu0 %308
        %312 = vset.pattern.permute.xlu0 0
        %313 = vperm.xlu0 %312, %v283
        %v314 = vpop.permute.xlu0 %313
        %317 = vset.pattern.permute.xlu0 0
        %318 = vperm.xlu0 %317, %v284
        %v319 = vpop.permute.xlu0 %318
        %322 = vset.pattern.permute.xlu0 0
        %323 = vperm.xlu0 %322, %v285
        %v324 = vpop.permute.xlu0 %323
        %v327 = vlaneseq
        %v328 = vshrl.u32 %v327, 7
        %v329 = vsub.s32 0, %v328
        %v330 = vrot.slane %v277, %v329
        %v331 = vlaneseq
        %v332 = vshrl.u32 %v331, 7
        %v333 = vsub.s32 1, %v332
        %v334 = vrot.slane %v277, %v333
        %v337 = vmul.f32 %v289, %v330
        %v338 = vmul.f32 %v289, %v334
        %v339 = vmul.f32 %v294, %v330
        %v340 = vmul.f32 %v294, %v334
        %v341 = vmul.f32 %v299, %v330
        %v342 = vmul.f32 %v299, %v334
        %v343 = vmul.f32 %v304, %v330
        %v344 = vmul.f32 %v304, %v334
        %v345 = vmul.f32 %v309, %v330
        %v346 = vmul.f32 %v309, %v334
        %v347 = vmul.f32 %v314, %v330
        %v348 = vmul.f32 %v314, %v334
        %v349 = vmul.f32 %v319, %v330
        %v350 = vmul.f32 %v319, %v334
        %v351 = vmul.f32 %v324, %v330
        %v352 = vmul.f32 %v324, %v334
        %v353 = vld [vmem:[%s2] sm:$0xff]
        %v354 = vld [vmem:[%s2 + $0x8] sm:$0xff]
        %v355 = vld [vmem:[%s2 + $0x10] sm:$0xff]
        %v356 = vld [vmem:[%s2 + $0x18] sm:$0xff]
        %v357 = vld [vmem:[%s2 + $0x20] sm:$0xff]
        %v358 = vld [vmem:[%s2 + $0x28] sm:$0xff]
        %v359 = vld [vmem:[%s2 + $0x30] sm:$0xff]
        %v360 = vld [vmem:[%s2 + $0x38] sm:$0xff]
        %362 = vset.pattern.permute.xlu0 0
        %363 = vperm.xlu0 %362, %v353
        %v364 = vpop.permute.xlu0 %363
        %367 = vset.pattern.permute.xlu0 0
        %368 = vperm.xlu0 %367, %v354
        %v369 = vpop.permute.xlu0 %368
        %372 = vset.pattern.permute.xlu0 0
        %373 = vperm.xlu0 %372, %v355
        %v374 = vpop.permute.xlu0 %373
        %377 = vset.pattern.permute.xlu0 0
        %378 = vperm.xlu0 %377, %v356
        %v379 = vpop.permute.xlu0 %378
        %382 = vset.pattern.permute.xlu0 0
        %383 = vperm.xlu0 %382, %v357
        %v384 = vpop.permute.xlu0 %383
        %387 = vset.pattern.permute.xlu0 0
        %388 = vperm.xlu0 %387, %v358
        %v389 = vpop.permute.xlu0 %388
        %392 = vset.pattern.permute.xlu0 0
        %393 = vperm.xlu0 %392, %v359
        %v394 = vpop.permute.xlu0 %393
        %397 = vset.pattern.permute.xlu0 0
        %398 = vperm.xlu0 %397, %v360
        %v399 = vpop.permute.xlu0 %398
        %v401 = vadd.f32 %v337, %v364
        %v402 = vadd.f32 %v338, %v364
        %v403 = vadd.f32 %v339, %v369
        %v404 = vadd.f32 %v340, %v369
        %v405 = vadd.f32 %v341, %v374
        %v406 = vadd.f32 %v342, %v374
        %v407 = vadd.f32 %v343, %v379
        %v408 = vadd.f32 %v344, %v379
        %v409 = vadd.f32 %v345, %v384
        %v410 = vadd.f32 %v346, %v384
        %v411 = vadd.f32 %v347, %v389
        %v412 = vadd.f32 %v348, %v389
        %v413 = vadd.f32 %v349, %v394
        %v414 = vadd.f32 %v350, %v394
        %v415 = vadd.f32 %v351, %v399
        %v416 = vadd.f32 %v352, %v399
        %v417 = vmax.f32 %v401, 0.0
        %v418 = vmax.f32 %v402, 0.0
        %v419 = vmax.f32 %v403, 0.0
        %v420 = vmax.f32 %v404, 0.0
        %v421 = vmax.f32 %v405, 0.0
        %v422 = vmax.f32 %v406, 0.0
        %v423 = vmax.f32 %v407, 0.0
        %v424 = vmax.f32 %v408, 0.0
        %v425 = vmax.f32 %v409, 0.0
        %v426 = vmax.f32 %v410, 0.0
        %v427 = vmax.f32 %v411, 0.0
        %v428 = vmax.f32 %v412, 0.0
        %v429 = vmax.f32 %v413, 0.0
        %v430 = vmax.f32 %v414, 0.0
        %v431 = vmax.f32 %v415, 0.0
        %v432 = vmax.f32 %v416, 0.0
        %v433 = vld [vmem:[%s3] sm:$0xff]
        %v434 = vld [vmem:[%s3 + $0x8] sm:$0xff]
        %v435 = vld [vmem:[%s3 + $0x10] sm:$0xff]
        %v436 = vld [vmem:[%s3 + $0x18] sm:$0xff]
        %v437 = vld [vmem:[%s4] sm:$0xff]
        %v438 = vld [vmem:[%s4 + $0x8] sm:$0xff]
        %v439 = vld [vmem:[%s4 + $0x10] sm:$0xff]
        %v440 = vld [vmem:[%s4 + $0x18] sm:$0xff]
        %442 = vset.pattern.permute.xlu0 0
        %443 = vperm.xlu0 %442, %v437
        %v444 = vpop.permute.xlu0 %443
        %447 = vset.pattern.permute.xlu0 0
        %448 = vperm.xlu0 %447, %v438
        %v449 = vpop.permute.xlu0 %448
        %452 = vset.pattern.permute.xlu0 0
        %453 = vperm.xlu0 %452, %v439
        %v454 = vpop.permute.xlu0 %453
        %457 = vset.pattern.permute.xlu0 0
        %458 = vperm.xlu0 %457, %v440
        %v459 = vpop.permute.xlu0 %458
        %vm461 = vcmask 523264
        %v463 = vsel %vm461, %v433, 0
        %v466 = vsel %vm461, %v434, 0
        %v469 = vsel %vm461, %v435, 0
        %v472 = vsel %vm461, %v436, 0
        %474 = vmatprep.subr.mxu0 %v418
        %475 = vmatpush1.msra.mxu0 %v417
        %476 = vmatprep.subr.mxu0 %v420
        %477 = vmatpush1.msra.mxu0 %v419
        %478 = vmatprep.subr.mxu0 %v422
        %479 = vmatpush1.msra.mxu0 %v421
        %480 = vmatprep.subr.mxu0 %v424
        %481 = vmatpush1.msra.mxu0 %v423
        %482 = vmatprep.subr.mxu0 %v426
        %483 = vmatpush1.msra.mxu0 %v425
        %484 = vmatprep.subr.mxu0 %v428
        %485 = vmatpush1.msra.mxu0 %v427
        %486 = vmatprep.subr.mxu0 %v430
        %487 = vmatpush1.msra.mxu0 %v429
        %488 = vmatprep.subr.mxu0 %v432
        %489 = vmatpush1.msra.mxu0 %v431
        %490 = vmatprep.subr.mxu0 0.0
        %491 = vmatpush1.msra.mxu0 0.0
        %492 = vmatprep.subr.mxu0 0.0
        %493 = vmatpush1.msra.mxu0 0.0
        %494 = vmatprep.subr.mxu0 0.0
        %495 = vmatpush1.msra.mxu0 0.0
        %496 = vmatprep.subr.mxu0 0.0
        %497 = vmatpush1.msra.mxu0 0.0
        %498 = vmatprep.subr.mxu0 0.0
        %499 = vmatpush1.msra.mxu0 0.0
        %500 = vmatprep.subr.mxu0 0.0
        %501 = vmatpush1.msra.mxu0 0.0
        %502 = vmatprep.subr.mxu0 0.0
        %503 = vmatpush1.msra.mxu0 0.0
        %504 = vmatprep.subr.mxu0 0.0
        %505 = vmatpush1.msra.mxu0 0.0
        %506 = vmatprep.subr.mxu0 0.0
        %507 = vmatpush1.msra.mxu0 0.0
        %508 = vmatprep.subr.mxu0 0.0
        %509 = vmatpush1.msra.mxu0 0.0
        %510 = vmatprep.subr.mxu0 0.0
        %511 = vmatpush1.msra.mxu0 0.0
        %512 = vmatprep.subr.mxu0 0.0
        %513 = vmatpush1.msra.mxu0 0.0
        %514 = vmatprep.subr.mxu0 0.0
        %515 = vmatpush1.msra.mxu0 0.0
        %516 = vmatprep.subr.mxu0 0.0
        %517 = vmatpush1.msra.mxu0 0.0
        %518 = vmatprep.subr.mxu0 0.0
        %519 = vmatpush1.msra.mxu0 0.0
        %520 = vmatprep.subr.mxu0 0.0
        %521 = vmatpush1.msra.mxu0 0.0
        %522 = vmatprep.subr.mxu0 0.0
        %523 = vmatpush1.msra.mxu0 0.0
        %524 = vmatprep.subr.mxu0 0.0
        %525 = vmatpush1.msra.mxu0 0.0
        %526 = vmatprep.subr.mxu0 0.0
        %527 = vmatpush1.msra.mxu0 0.0
        %528 = vmatprep.subr.mxu0 0.0
        %529 = vmatpush1.msra.mxu0 0.0
        %530 = vmatprep.subr.mxu0 0.0
        %531 = vmatpush1.msra.mxu0 0.0
        %532 = vmatprep.subr.mxu0 0.0
        %533 = vmatpush1.msra.mxu0 0.0
        %534 = vmatprep.subr.mxu0 0.0
        %535 = vmatpush1.msra.mxu0 0.0
        %536 = vmatprep.subr.mxu0 0.0
        %537 = vmatpush1.msra.mxu0 0.0
        %538 = vmatprep.mubr.f32.mxu0 0.0
        %539 = vmatmul.mubr.f32.gmra.mrb[0].mxu0 %v463
        %v540 = vpop.f32.mrb[0].mxu0
        %v541 = vadd.f32 %v444, %v540
        %v542 = vpop.f32.mrb[0].mxu0
        %v543 = vadd.f32 %v444, %v542
        %544 = vmatprep.mubr.f32.mxu0 0.0
        %545 = vmatmul.mubr.f32.gmra.mrb[0].mxu0 %v466
        %v546 = vpop.f32.mrb[0].mxu0
        %v547 = vadd.f32 %v449, %v546
        %v548 = vpop.f32.mrb[0].mxu0
        %v549 = vadd.f32 %v449, %v548
        %550 = vmatprep.mubr.f32.mxu0 0.0
        %551 = vmatmul.mubr.f32.gmra.mrb[0].mxu0 %v469
        %v552 = vpop.f32.mrb[0].mxu0
        %v553 = vadd.f32 %v454, %v552
        %v554 = vpop.f32.mrb[0].mxu0
        %v555 = vadd.f32 %v454, %v554
        %556 = vmatprep.mubr.f32.mxu0 0.0
        %557 = vmatmul.mubr.f32.gmra.mrb[0].mxu0 %v472
        %v558 = vpop.f32.mrb[0].mxu0
        %v559 = vadd.f32 %v459, %v558
        %v560 = vpop.f32.mrb[0].mxu0
        %v561 = vadd.f32 %v459, %v560
        %562 = vdwg.mxu0
        %v563 = vmax.f32 %v541, 0.0
        %v564 = vmax.f32 %v543, 0.0
        %v565 = vmax.f32 %v547, 0.0
        %v566 = vmax.f32 %v549, 0.0
        %v567 = vmax.f32 %v553, 0.0
        %v568 = vmax.f32 %v555, 0.0
        %v569 = vmax.f32 %v559, 0.0
        %v570 = vmax.f32 %v561, 0.0
        %v571 = vld [vmem:[%s5] sm:$0xf]
        %v572 = vld [vmem:[%s6] sm:$0xf]
        %574 = vset.pattern.permute.xlu0 0
        %575 = vperm.xlu0 %574, %v572
        %v576 = vpop.permute.xlu0 %575
        %vm578 = vcmask 261120
        %v580 = vsel %vm578, %v571, 0
        %582 = vmatprep.subr.mxu0 %v564
        %583 = vmatpush1.msra.mxu0 %v563
        %584 = vmatprep.subr.mxu0 %v566
        %585 = vmatpush1.msra.mxu0 %v565
        %586 = vmatprep.subr.mxu0 %v568
        %587 = vmatpush1.msra.mxu0 %v567
        %588 = vmatprep.subr.mxu0 %v570
        %589 = vmatpush1.msra.mxu0 %v569
        %590 = vmatprep.subr.mxu0 0.0
        %591 = vmatpush1.msra.mxu0 0.0
        %592 = vmatprep.subr.mxu0 0.0
        %593 = vmatpush1.msra.mxu0 0.0
        %594 = vmatprep.subr.mxu0 0.0
        %595 = vmatpush1.msra.mxu0 0.0
        %596 = vmatprep.subr.mxu0 0.0
        %597 = vmatpush1.msra.mxu0 0.0
        %598 = vmatprep.subr.mxu0 0.0
        %599 = vmatpush1.msra.mxu0 0.0
        %600 = vmatprep.subr.mxu0 0.0
        %601 = vmatpush1.msra.mxu0 0.0
        %602 = vmatprep.subr.mxu0 0.0
        %603 = vmatpush1.msra.mxu0 0.0
        %604 = vmatprep.subr.mxu0 0.0
        %605 = vmatpush1.msra.mxu0 0.0
        %606 = vmatprep.subr.mxu0 0.0
        %607 = vmatpush1.msra.mxu0 0.0
        %608 = vmatprep.subr.mxu0 0.0
        %609 = vmatpush1.msra.mxu0 0.0
        %610 = vmatprep.subr.mxu0 0.0
        %611 = vmatpush1.msra.mxu0 0.0
        %612 = vmatprep.subr.mxu0 0.0
        %613 = vmatpush1.msra.mxu0 0.0
        %614 = vmatprep.subr.mxu0 0.0
        %615 = vmatpush1.msra.mxu0 0.0
        %616 = vmatprep.subr.mxu0 0.0
        %617 = vmatpush1.msra.mxu0 0.0
        %618 = vmatprep.subr.mxu0 0.0
        %619 = vmatpush1.msra.mxu0 0.0
        %620 = vmatprep.subr.mxu0 0.0
        %621 = vmatpush1.msra.mxu0 0.0
        %622 = vmatprep.subr.mxu0 0.0
        %623 = vmatpush1.msra.mxu0 0.0
        %624 = vmatprep.subr.mxu0 0.0
        %625 = vmatpush1.msra.mxu0 0.0
        %626 = vmatprep.subr.mxu0 0.0
        %627 = vmatpush1.msra.mxu0 0.0
        %628 = vmatprep.subr.mxu0 0.0
        %629 = vmatpush1.msra.mxu0 0.0
        %630 = vmatprep.subr.mxu0 0.0
        %631 = vmatpush1.msra.mxu0 0.0
        %632 = vmatprep.subr.mxu0 0.0
        %633 = vmatpush1.msra.mxu0 0.0
        %634 = vmatprep.subr.mxu0 0.0
        %635 = vmatpush1.msra.mxu0 0.0
        %636 = vmatprep.subr.mxu0 0.0
        %637 = vmatpush1.msra.mxu0 0.0
        %638 = vmatprep.subr.mxu0 0.0
        %639 = vmatpush1.msra.mxu0 0.0
        %640 = vmatprep.subr.mxu0 0.0
        %641 = vmatpush1.msra.mxu0 0.0
        %642 = vmatprep.subr.mxu0 0.0
        %643 = vmatpush1.msra.mxu0 0.0
        %644 = vmatprep.subr.mxu0 0.0
        %645 = vmatpush1.msra.mxu0 0.0
        %646 = vmatprep.mubr.f32.mxu0 0.0
        %647 = vmatmul.mubr.f32.gmra.mrb[0].mxu0 %v580
        %v648 = vpop.f32.mrb[0].mxu0
        %v649 = vadd.f32 %v576, %v648
        %v650 = vpop.f32.mrb[0].mxu0
        %v651 = vadd.f32 %v576, %v650
        %652 = vdwg.mxu0
        %v655 = vcombine.low %v649, %v651
        %657 = vst [vmem:[%s270] sm:$0xff] %v655
        %s658 = sand.u32 %s181, 1
        %s659 = scalar_lea.sflag [#allocation3], %s658
        %s660 = sand.u32 %s181, 1
        %s661 = smul.addr %s660, 8
        %s662 = scalar_lea.vmem [#allocation2], %s661
        // Predicated region
        $region49: #{mlp_forward.1} parent=47 // pred_check
          %p663 = pneg %p191
        $region50: #{mlp_forward.1} parent=47 // pred_check_branch
          %665 = sbr.rel (%p663) target = $region52
        $region51: #{mlp_forward.1} parent=47 // pred_region
          %s666 = smul.u32 2, %s21
          %s668 = ssub.s32 128, 128
          %669 = vsyncadd %s659, %s668
          %s670 = smul.addr %s666, 64
          %s671 = scalar_lea.hbm %s7, %s670
          %s673 = sshll.u32 %s662, 4
          %s674 = int_to_ptr.vmem [resolvable:$true] %s673
          %676 = dma.vmem_to_hbm [thread:$0]  %s674, 128, %s671, %s659
        $region52: #{mlp_forward.1} parent=47 // pred_fallthru
          _
      $region48: #{mlp_forward.1} parent=5 // pred_fallthru
        _
      %p677 = scmp.le.s32.totalorder 2, %s16
      // Predicated region
      $region53: #{mlp_forward.1} parent=5 // pred_check
        %p678 = pneg %p677
      $region54: #{mlp_forward.1} parent=5 // pred_check_branch
        %680 = sbr.rel (%p678) target = $region56
      $region55: #{mlp_forward.1} parent=5 // pred_region
        %s681 = ssub.s32 %s16, 2
        // Predicated region
        $region57: #{mlp_forward.1} parent=55 // pred_check
          %p682 = pneg %p197
        $region58: #{mlp_forward.1} parent=55 // pred_check_branch
          %684 = sbr.rel (%p682) target = $region60
        $region59: #{mlp_forward.1} parent=55 // pred_region
          %s685 = sand.u32 %s182, 1
          %s686 = scalar_lea.sflag [#allocation3], %s685
          %s687 = sand.u32 %s182, 1
          %s688 = smul.addr %s687, 8
          %s689 = scalar_lea.vmem [#allocation2], %s688
          %690 = dma.done %s686, 128
        $region60: #{mlp_forward.1} parent=55 // pred_fallthru
          _
      $region56: #{mlp_forward.1} parent=5 // pred_fallthru
        _
    $region6: #{mlp_forward.1} parent=1 // loop_footer
      %s20 = sadd.s32 1, %s16
    $region7: #{mlp_forward.1} parent=1 // loop_footer_branch
      %15 = sbr.rel target = $region3
    $region8: #{mlp_forward.1} parent=1 // loop_exit
      _
    %691 = vsyncpa [#allocation3], 1
    %s692 = scalar_lea.sflag [#allocation3], 1
    %693 = vsyncpa %s692, 1

</llo_original>
